<compile_context>
chip_gen: v5e
topology: v5e:2x2
jax: 0.10.0
libtpu: 0.0.40
codegen_flags: <defaults>
</compile_context>

<pallas_src>
import functools

import jax
import jax.numpy as jnp
from jax.experimental import pallas as pl
from jax.experimental.pallas import tpu as pltpu

# Logical dims from the PyTorch module.
D_IN, D_H, D_OUT = 1000, 100, 1
# Padded dims: hidden to lane width, output to a small sublane-friendly width.
D_H_P, D_OUT_P = 128, 8


def _round_up(n, m):
    return (n + m - 1) // m * m


def mlp_kernel(x_ref, w1_ref, b1_ref, w2_ref, b2_ref, w3_ref, b3_ref, o_ref):
    # Layer 1: [tb, 1000] @ [1000, 128] (f32, MXU) + bias, ReLU.
    h = jnp.dot(x_ref[...], w1_ref[...], preferred_element_type=jnp.float32)
    h = jnp.maximum(h + b1_ref[...], 0.0)          # dropout p=0.0 -> identity

    # Layer 2: [tb, 128] @ [128, 128]  (padded cols of h are exactly 0)
    h = jnp.dot(h, w2_ref[...], preferred_element_type=jnp.float32)
    h = jnp.maximum(h + b2_ref[...], 0.0)

    # Layer 3: [tb, 128] @ [128, 8]  (only column 0 carries the real output;
    # padded columns of w3/b3 are zero)
    out = jnp.dot(h, w3_ref[...], preferred_element_type=jnp.float32)
    o_ref[...] = (out + b3_ref[...]).astype(o_ref.dtype)


def prepare_params(w1, b1, w2, b2, w3, b3):
    """Zero-pad feature dims to aligned sizes (done once, f32 throughout)."""
    def pad2(a, rows, cols):
        return jnp.pad(
            a, ((0, rows - a.shape[0]), (0, cols - a.shape[1]))
        ).astype(jnp.float32)

    w1p = pad2(w1, D_IN, D_H_P)        # (1000, 128)
    w2p = pad2(w2, D_H_P, D_H_P)       # (128, 128)
    w3p = pad2(w3, D_H_P, D_OUT_P)     # (128, 8)
    b1p = pad2(b1, 1, D_H_P)
    b2p = pad2(b2, 1, D_H_P)
    b3p = pad2(b3, 1, D_OUT_P)
    return w1p, b1p, w2p, b2p, w3p, b3p


@functools.partial(jax.jit, static_argnames=("tile_b",))
def mlp_forward(x, w1p, b1p, w2p, b2p, w3p, b3p, tile_b=1024):
    B = x.shape[0]
    # Batch tile: multiple of 16, capped so moderate batches still give >=2
    # grid steps (dual-TensorCore sharding on v7x), never (much) larger than B.
    tb = max(16, min(tile_b, _round_up(pl.cdiv(B, 2), 16)))
    tb = max(8, min(tb, _round_up(B, 8)))
    grid = (pl.cdiv(B, tb),)           # ragged last block handled by Pallas

    weight_bytes = 4 * (D_IN * D_H_P + D_H_P * D_H_P + D_H_P * D_OUT_P
                        + 2 * D_H_P + D_OUT_P)
    cost = pl.CostEstimate(
        flops=2 * B * (D_IN * D_H_P + D_H_P * D_H_P + D_H_P * D_OUT_P),
        transcendentals=0,
        bytes_accessed=B * D_IN * 4 + weight_bytes + B * D_OUT_P * 4,
    )

    out_padded = pl.pallas_call(
        mlp_kernel,
        out_shape=jax.ShapeDtypeStruct((B, D_OUT_P), jnp.float32),
        grid=grid,
        in_specs=[
            pl.BlockSpec((tb, D_IN), lambda i: (i, 0)),        # x: streamed, unpadded
            pl.BlockSpec((D_IN, D_H_P), lambda i: (0, 0)),     # w1: VMEM-resident
            pl.BlockSpec((1, D_H_P), lambda i: (0, 0)),        # b1
            pl.BlockSpec((D_H_P, D_H_P), lambda i: (0, 0)),    # w2
            pl.BlockSpec((1, D_H_P), lambda i: (0, 0)),        # b2
            pl.BlockSpec((D_H_P, D_OUT_P), lambda i: (0, 0)),  # w3
            pl.BlockSpec((1, D_OUT_P), lambda i: (0, 0)),      # b3
        ],
        out_specs=pl.BlockSpec((tb, D_OUT_P), lambda i: (i, 0)),
        compiler_params=pltpu.CompilerParams(
            dimension_semantics=("parallel",),      # shard batch across TCs on v7x
            vmem_limit_bytes=32 * 1024 * 1024,      # tb=1024 f32 x tiles fit easily
        ),
        cost_estimate=cost,
    )(x, w1p, b1p, w2p, b2p, w3p, b3p)

    # Real result is column 0 of the narrow padded output.
    return out_padded[:, :D_OUT]


def init_params(key):
    """Deterministic init mirroring nn.Linear's U(-1/sqrt(fan_in), 1/sqrt(fan_in)).

    Weights are stored [in_features, out_features] (transposed vs PyTorch) so the
    kernel computes plain row-major x @ W + b.
    """
    k1, k2, k3, k4, k5, k6 = jax.random.split(key, 6)

    def uniform(k, shape, fan_in):
        bound = 1.0 / (fan_in ** 0.5)
        return jax.random.uniform(k, shape, jnp.float32, -bound, bound)

    w1 = uniform(k1, (D_IN, D_H), D_IN)
    b1 = uniform(k2, (1, D_H), D_IN)
    w2 = uniform(k3, (D_H, D_H), D_H)
    b2 = uniform(k4, (1, D_H), D_H)
    w3 = uniform(k5, (D_H, D_OUT), D_H)
    b3 = uniform(k6, (1, D_OUT), D_H)
    return w1, b1, w2, b2, w3, b3


def reference_forward(x, w1, b1, w2, b2, w3, b3):
    h = jnp.maximum(x @ w1 + b1, 0.0)
    h = jnp.maximum(h @ w2 + b2, 0.0)
    return h @ w3 + b3


if __name__ == "__main__":
    key = jax.random.PRNGKey(0)
    kx, kp = jax.random.split(key)

    B = 8
    x = jax.random.normal(kx, (B, D_IN), jnp.float32)
    raw_params = init_params(kp)                 # f32, [in, out] layout
    padded_params = prepare_params(*raw_params)  # padded, f32, done once

    out = mlp_forward(x, *padded_params)
    out = jax.block_until_ready(out)

    ref = reference_forward(x, *raw_params)
    assert out.shape == (B, D_OUT), out.shape
    # f32 weights/activations; tolerance covers any reduced-precision MXU passes.
    assert jnp.allclose(out, ref, atol=2e-2, rtol=2e-2), "mismatch vs reference"

    print("KERNEL_OK")
</pallas_src>

<mosaic_0001>
module attributes {stable_mosaic.version = 11 : i64} {
  func.func @mlp_kernel(%arg0: i32, %arg1: memref<8x1000xf32, #tpu.memory_space<vmem>>, %arg2: memref<1000x128xf32, #tpu.memory_space<vmem>>, %arg3: memref<1x128xf32, #tpu.memory_space<vmem>>, %arg4: memref<128x128xf32, #tpu.memory_space<vmem>>, %arg5: memref<1x128xf32, #tpu.memory_space<vmem>>, %arg6: memref<128x8xf32, #tpu.memory_space<vmem>>, %arg7: memref<1x8xf32, #tpu.memory_space<vmem>>, %arg8: memref<8x8xf32, #tpu.memory_space<vmem>>) attributes {dimension_semantics = [#tpu.dimension_semantics<parallel>], iteration_bounds = array<i64: 1>, scalar_prefetch = 0 : i64, scratch_operands = 0 : i64, tpu.core_type = #tpu.core_type<tc>, window_params = [{transform_indices = @transform_0, window_bounds = array<i64: 8, 1000>}, {pipeline_mode = #tpu.pipeline_mode<synchronous>, transform_indices = @transform_1, window_bounds = array<i64: 1000, 128>}, {pipeline_mode = #tpu.pipeline_mode<synchronous>, transform_indices = @transform_2, window_bounds = array<i64: 1, 128>}, {pipeline_mode = #tpu.pipeline_mode<synchronous>, transform_indices = @transform_3, window_bounds = array<i64: 128, 128>}, {pipeline_mode = #tpu.pipeline_mode<synchronous>, transform_indices = @transform_4, window_bounds = array<i64: 1, 128>}, {pipeline_mode = #tpu.pipeline_mode<synchronous>, transform_indices = @transform_5, window_bounds = array<i64: 128, 8>}, {pipeline_mode = #tpu.pipeline_mode<synchronous>, transform_indices = @transform_6, window_bounds = array<i64: 1, 8>}, {transform_indices = @transform_7, window_bounds = array<i64: 8, 8>}]} {
    %c0 = arith.constant 0 : index
    %c0_0 = arith.constant 0 : index
    %0 = vector.load %arg1[%c0, %c0_0] : memref<8x1000xf32, #tpu.memory_space<vmem>>, vector<8x1000xf32>
    %c0_1 = arith.constant 0 : index
    %c0_2 = arith.constant 0 : index
    %1 = vector.load %arg2[%c0_1, %c0_2] : memref<1000x128xf32, #tpu.memory_space<vmem>>, vector<1000x128xf32>
    %cst = arith.constant dense<0.000000e+00> : vector<8x128xf32>
    %2 = tpu.matmul %0, %1, %cst {dimension_numbers = #tpu.dot_dimension_numbers<[1], [0], [0], [1], [0, 0, 1, 1], [], []>} : vector<8x1000xf32>, vector<1000x128xf32>, vector<8x128xf32> -> vector<8x128xf32>
    %c0_3 = arith.constant 0 : index
    %c0_4 = arith.constant 0 : index
    %3 = vector.load %arg3[%c0_3, %c0_4] : memref<1x128xf32, #tpu.memory_space<vmem>>, vector<1x128xf32>
    %4 = vector.broadcast %3 : vector<1x128xf32> to vector<8x128xf32>
    %5 = arith.addf %2, %4 : vector<8x128xf32>
    %cst_5 = arith.constant 0.000000e+00 : f32
    %6 = vector.broadcast %cst_5 : f32 to vector<8x128xf32>
    %7 = arith.maximumf %5, %6 : vector<8x128xf32>
    %c0_6 = arith.constant 0 : index
    %c0_7 = arith.constant 0 : index
    %8 = vector.load %arg4[%c0_6, %c0_7] : memref<128x128xf32, #tpu.memory_space<vmem>>, vector<128x128xf32>
    %cst_8 = arith.constant dense<0.000000e+00> : vector<8x128xf32>
    %9 = tpu.matmul %7, %8, %cst_8 {dimension_numbers = #tpu.dot_dimension_numbers<[1], [0], [0], [1], [0, 0, 1, 1], [], []>} : vector<8x128xf32>, vector<128x128xf32>, vector<8x128xf32> -> vector<8x128xf32>
    %c0_9 = arith.constant 0 : index
    %c0_10 = arith.constant 0 : index
    %10 = vector.load %arg5[%c0_9, %c0_10] : memref<1x128xf32, #tpu.memory_space<vmem>>, vector<1x128xf32>
    %11 = vector.broadcast %10 : vector<1x128xf32> to vector<8x128xf32>
    %12 = arith.addf %9, %11 : vector<8x128xf32>
    %cst_11 = arith.constant 0.000000e+00 : f32
    %13 = vector.broadcast %cst_11 : f32 to vector<8x128xf32>
    %14 = arith.maximumf %12, %13 : vector<8x128xf32>
    %c0_12 = arith.constant 0 : index
    %c0_13 = arith.constant 0 : index
    %15 = vector.load %arg6[%c0_12, %c0_13] : memref<128x8xf32, #tpu.memory_space<vmem>>, vector<128x8xf32>
    %cst_14 = arith.constant dense<0.000000e+00> : vector<8x8xf32>
    %16 = tpu.matmul %14, %15, %cst_14 {dimension_numbers = #tpu.dot_dimension_numbers<[1], [0], [0], [1], [0, 0, 1, 1], [], []>} : vector<8x128xf32>, vector<128x8xf32>, vector<8x8xf32> -> vector<8x8xf32>
    %c0_15 = arith.constant 0 : index
    %c0_16 = arith.constant 0 : index
    %17 = vector.load %arg7[%c0_15, %c0_16] : memref<1x8xf32, #tpu.memory_space<vmem>>, vector<1x8xf32>
    %18 = vector.broadcast %17 : vector<1x8xf32> to vector<8x8xf32>
    %19 = arith.addf %16, %18 : vector<8x8xf32>
    %c0_17 = arith.constant 0 : index
    %c0_18 = arith.constant 0 : index
    %20 = vector.load %arg8[%c0_17, %c0_18] : memref<8x8xf32, #tpu.memory_space<vmem>>, vector<8x8xf32>
    tpu.vector_store %arg8[%c0_17, %c0_18], %19 {strides = array<i32>} : memref<8x8xf32, #tpu.memory_space<vmem>>, vector<8x8xf32>,
    return
  }
  func.func @transform_0(%arg0: i32) -> (i32, i32) {
    %c0_i32 = arith.constant 0 : i32
    %c0_i32_0 = arith.constant 0 : i32
    return %arg0, %c0_i32 : i32, i32
  }
  func.func @transform_1(%arg0: i32) -> (i32, i32) {
    %c0_i32 = arith.constant 0 : i32
    %c0_i32_0 = arith.constant 0 : i32
    %c0_i32_1 = arith.constant 0 : i32
    return %c0_i32, %c0_i32_0 : i32, i32
  }
  func.func @transform_2(%arg0: i32) -> (i32, i32) {
    %c0_i32 = arith.constant 0 : i32
    %c0_i32_0 = arith.constant 0 : i32
    %c0_i32_1 = arith.constant 0 : i32
    return %c0_i32, %c0_i32_0 : i32, i32
  }
  func.func @transform_3(%arg0: i32) -> (i32, i32) {
    %c0_i32 = arith.constant 0 : i32
    %c0_i32_0 = arith.constant 0 : i32
    %c0_i32_1 = arith.constant 0 : i32
    return %c0_i32, %c0_i32_0 : i32, i32
  }
  func.func @transform_4(%arg0: i32) -> (i32, i32) {
    %c0_i32 = arith.constant 0 : i32
    %c0_i32_0 = arith.constant 0 : i32
    %c0_i32_1 = arith.constant 0 : i32
    return %c0_i32, %c0_i32_0 : i32, i32
  }
  func.func @transform_5(%arg0: i32) -> (i32, i32) {
    %c0_i32 = arith.constant 0 : i32
    %c0_i32_0 = arith.constant 0 : i32
    %c0_i32_1 = arith.constant 0 : i32
    return %c0_i32, %c0_i32_0 : i32, i32
  }
  func.func @transform_6(%arg0: i32) -> (i32, i32) {
    %c0_i32 = arith.constant 0 : i32
    %c0_i32_0 = arith.constant 0 : i32
    %c0_i32_1 = arith.constant 0 : i32
    return %c0_i32, %c0_i32_0 : i32, i32
  }
  func.func @transform_7(%arg0: i32) -> (i32, i32) {
    %c0_i32 = arith.constant 0 : i32
    %c0_i32_0 = arith.constant 0 : i32
    return %arg0, %c0_i32 : i32, i32
  }
}

</mosaic_0001>

<llo_original>
// kernel: mlp_forward.1
$region0: #{mlp_forward.1}
  #allocation0 [shape = 'u32[]', space=smem, size = 0x4, offset = 0x4, fixed_abs, tag = 'smem constant byte address 0x4 - core index']
  #allocation1 [shape = 'u32[72,128]{1,0:T(1,128)}', space=vmem, size = 0x9000, scoped, tag = 'internal scratch']
  %s0 = inlined_call_operand.hbm [shape: f32[8,1000], index: 0, kind: input, shape index: {}]
  %s1 = inlined_call_operand.hbm [shape: f32[1000,128], index: 1, kind: input, shape index: {}]
  %s2 = inlined_call_operand.vmem [shape: f32[1,128], index: 2, kind: input, shape index: {}]
  %s3 = inlined_call_operand.vmem [shape: f32[128,128], index: 3, kind: input, shape index: {}]
  %s4 = inlined_call_operand.vmem [shape: f32[1,128], index: 4, kind: input, shape index: {}]
  %s5 = inlined_call_operand.vmem [shape: f32[128,8], index: 5, kind: input, shape index: {}]
  %s6 = inlined_call_operand.vmem [shape: f32[1,8], index: 6, kind: input, shape index: {}]
  %s7 = inlined_call_operand.vmem [shape: f32[8,8], index: 7, kind: output, shape index: {}]
  %s8 = sld [smem:[#allocation0]]
  $region46: #{mlp_forward.1} parent=0
    _
  %s10 = ssub.s32 1, %s8
  %s11 = scalar_select 0, %s10, %s8
  $region1: #{mlp_forward.1} parent=0
    #allocation2 [shape = 'u8[32768]{0}', space=vmem, size = 0x8000, scoped, tag = 'input window, operand 0, single buffered']
    #allocation3 [shape = 's32[1]{0}', space=sflag, size = 0x4, scoped, tag = 'scoped memory for mlp_forward.1']
    #allocation4 [shape = 'u8[512000]{0}', space=vmem, size = 0x7d000, scoped, tag = 'input window, operand 1, single buffered']
    #allocation5 [shape = 's32[1]{0}', space=sflag, size = 0x4, scoped, tag = 'scoped memory for mlp_forward.1']
    %12 = vsyncpa [#allocation3], 0
    %13 = vsyncpa [#allocation5], 0
    // Predicated region
    $region2: #{mlp_forward.1} parent=1 // pred_check
      _
    $region3: #{mlp_forward.1} parent=1 // pred_check_branch
      %15 = sbr.rel (0) target = $region5
    $region4: #{mlp_forward.1} parent=1 // pred_region
      %17 = vsyncadd [#allocation3], 0
      %s19 = sshll.u32 %s0, 4
      %s20 = int_to_ptr.hbm [resolvable:$true] %s19
      %s21 = sshll.u32 [#allocation2], 4
      %s22 = int_to_ptr.vmem [resolvable:$true] %s21
      %24 = dma.hbm_to_vmem [thread:$0]  %s20, 1024, %s22, [#allocation3]
    $region5: #{mlp_forward.1} parent=1 // pred_fallthru
      _
    // Predicated region
    $region6: #{mlp_forward.1} parent=1 // pred_check
      _
    $region7: #{mlp_forward.1} parent=1 // pred_check_branch
      %26 = sbr.rel (0) target = $region9
    $region8: #{mlp_forward.1} parent=1 // pred_region
      %28 = vsyncadd [#allocation5], 0
      %s29 = sshll.u32 %s1, 4
      %s30 = int_to_ptr.hbm [resolvable:$true] %s29
      %s31 = sshll.u32 [#allocation4], 4
      %s32 = int_to_ptr.vmem [resolvable:$true] %s31
      %37 = dma.hbm_to_vmem [thread:$0]  %s30, 16000, %s32, [#allocation5], 128, 128, 8
    $region9: #{mlp_forward.1} parent=1 // pred_fallthru
      _
    // Predicated region
    $region10: #{mlp_forward.1} parent=1 // pred_check
      _
    $region11: #{mlp_forward.1} parent=1 // pred_check_branch
      %39 = sbr.rel (0) target = $region13
    $region12: #{mlp_forward.1} parent=1 // pred_region
      _
    $region13: #{mlp_forward.1} parent=1 // pred_fallthru
      _
    // Predicated region
    $region14: #{mlp_forward.1} parent=1 // pred_check
      _
    $region15: #{mlp_forward.1} parent=1 // pred_check_branch
      %41 = sbr.rel (0) target = $region17
    $region16: #{mlp_forward.1} parent=1 // pred_region
      _
    $region17: #{mlp_forward.1} parent=1 // pred_fallthru
      _
    // Predicated region
    $region18: #{mlp_forward.1} parent=1 // pred_check
      _
    $region19: #{mlp_forward.1} parent=1 // pred_check_branch
      %43 = sbr.rel (0) target = $region21
    $region20: #{mlp_forward.1} parent=1 // pred_region
      _
    $region21: #{mlp_forward.1} parent=1 // pred_fallthru
      _
    // Predicated region
    $region22: #{mlp_forward.1} parent=1 // pred_check
      _
    $region23: #{mlp_forward.1} parent=1 // pred_check_branch
      %45 = sbr.rel (0) target = $region25
    $region24: #{mlp_forward.1} parent=1 // pred_region
      _
    $region25: #{mlp_forward.1} parent=1 // pred_fallthru
      _
    // Predicated region
    $region26: #{mlp_forward.1} parent=1 // pred_check
      _
    $region27: #{mlp_forward.1} parent=1 // pred_check_branch
      %47 = sbr.rel (0) target = $region29
    $region28: #{mlp_forward.1} parent=1 // pred_region
      _
    $region29: #{mlp_forward.1} parent=1 // pred_fallthru
      _
    // Predicated region
    $region30: #{mlp_forward.1} parent=1 // pred_check
      _
    $region31: #{mlp_forward.1} parent=1 // pred_check_branch
      %49 = sbr.rel (0) target = $region33
    $region32: #{mlp_forward.1} parent=1 // pred_region
      %51 = dma.done [#allocation3], 1024
    $region33: #{mlp_forward.1} parent=1 // pred_fallthru
      _
    // Predicated region
    $region34: #{mlp_forward.1} parent=1 // pred_check
      _
    $region35: #{mlp_forward.1} parent=1 // pred_check_branch
      %53 = sbr.rel (0) target = $region37
    $region36: #{mlp_forward.1} parent=1 // pred_region
      %55 = dma.done [#allocation5], 16000
    $region37: #{mlp_forward.1} parent=1 // pred_fallthru
      _
    %v56 = vld [vmem:[#allocation2] sm:$0xff]
    %v57 = vld [vmem:[#allocation2 + $0x8] sm:$0xff]
    %v58 = vld [vmem:[#allocation2 + $0x10] sm:$0xff]
    %v59 = vld [vmem:[#allocation2 + $0x18] sm:$0xff]
    %v60 = vld [vmem:[#allocation2 + $0x20] sm:$0xff]
    %v61 = vld [vmem:[#allocation2 + $0x28] sm:$0xff]
    %v62 = vld [vmem:[#allocation2 + $0x30] sm:$0xff]
    %v63 = vld [vmem:[#allocation2 + $0x38] sm:$0xff]
    %v64 = vld [vmem:[#allocation4] sm:$0xff]
    %v65 = vld [vmem:[#allocation4 + $0x8] sm:$0xff]
    %v66 = vld [vmem:[#allocation4 + $0x10] sm:$0xff]
    %v67 = vld [vmem:[#allocation4 + $0x18] sm:$0xff]
    %v68 = vld [vmem:[#allocation4 + $0x20] sm:$0xff]
    %v69 = vld [vmem:[#allocation4 + $0x28] sm:$0xff]
    %v70 = vld [vmem:[#allocation4 + $0x30] sm:$0xff]
    %v71 = vld [vmem:[#allocation4 + $0x38] sm:$0xff]
    %v72 = vld [vmem:[#allocation4 + $0x40] sm:$0xff]
    %v73 = vld [vmem:[#allocation4 + $0x48] sm:$0xff]
    %v74 = vld [vmem:[#allocation4 + $0x50] sm:$0xff]
    %v75 = vld [vmem:[#allocation4 + $0x58] sm:$0xff]
    %v76 = vld [vmem:[#allocation4 + $0x60] sm:$0xff]
    %v77 = vld [vmem:[#allocation4 + $0x68] sm:$0xff]
    %v78 = vld [vmem:[#allocation4 + $0x70] sm:$0xff]
    %v79 = vld [vmem:[#allocation4 + $0x78] sm:$0xff]
    %v80 = vld [vmem:[#allocation4 + $0x80] sm:$0xff]
    %v81 = vld [vmem:[#allocation4 + $0x88] sm:$0xff]
    %v82 = vld [vmem:[#allocation4 + $0x90] sm:$0xff]
    %v83 = vld [vmem:[#allocation4 + $0x98] sm:$0xff]
    %v84 = vld [vmem:[#allocation4 + $0xa0] sm:$0xff]
    %v85 = vld [vmem:[#allocation4 + $0xa8] sm:$0xff]
    %v86 = vld [vmem:[#allocation4 + $0xb0] sm:$0xff]
    %v87 = vld [vmem:[#allocation4 + $0xb8] sm:$0xff]
    %v88 = vld [vmem:[#allocation4 + $0xc0] sm:$0xff]
    %v89 = vld [vmem:[#allocation4 + $0xc8] sm:$0xff]
    %v90 = vld [vmem:[#allocation4 + $0xd0] sm:$0xff]
    %v91 = vld [vmem:[#allocation4 + $0xd8] sm:$0xff]
    %v92 = vld [vmem:[#allocation4 + $0xe0] sm:$0xff]
    %v93 = vld [vmem:[#allocation4 + $0xe8] sm:$0xff]
    %v94 = vld [vmem:[#allocation4 + $0xf0] sm:$0xff]
    %v95 = vld [vmem:[#allocation4 + $0xf8] sm:$0xff]
    %v96 = vld [vmem:[#allocation4 + $0x100] sm:$0xff]
    %v97 = vld [vmem:[#allocation4 + $0x108] sm:$0xff]
    %v98 = vld [vmem:[#allocation4 + $0x110] sm:$0xff]
    %v99 = vld [vmem:[#allocation4 + $0x118] sm:$0xff]
    %v100 = vld [vmem:[#allocation4 + $0x120] sm:$0xff]
    %v101 = vld [vmem:[#allocation4 + $0x128] sm:$0xff]
    %v102 = vld [vmem:[#allocation4 + $0x130] sm:$0xff]
    %v103 = vld [vmem:[#allocation4 + $0x138] sm:$0xff]
    %v104 = vld [vmem:[#allocation4 + $0x140] sm:$0xff]
    %v105 = vld [vmem:[#allocation4 + $0x148] sm:$0xff]
    %v106 = vld [vmem:[#allocation4 + $0x150] sm:$0xff]
    %v107 = vld [vmem:[#allocation4 + $0x158] sm:$0xff]
    %v108 = vld [vmem:[#allocation4 + $0x160] sm:$0xff]
    %v109 = vld [vmem:[#allocation4 + $0x168] sm:$0xff]
    %v110 = vld [vmem:[#allocation4 + $0x170] sm:$0xff]
    %v111 = vld [vmem:[#allocation4 + $0x178] sm:$0xff]
    %v112 = vld [vmem:[#allocation4 + $0x180] sm:$0xff]
    %v113 = vld [vmem:[#allocation4 + $0x188] sm:$0xff]
    %v114 = vld [vmem:[#allocation4 + $0x190] sm:$0xff]
    %v115 = vld [vmem:[#allocation4 + $0x198] sm:$0xff]
    %v116 = vld [vmem:[#allocation4 + $0x1a0] sm:$0xff]
    %v117 = vld [vmem:[#allocation4 + $0x1a8] sm:$0xff]
    %v118 = vld [vmem:[#allocation4 + $0x1b0] sm:$0xff]
    %v119 = vld [vmem:[#allocation4 + $0x1b8] sm:$0xff]
    %v120 = vld [vmem:[#allocation4 + $0x1c0] sm:$0xff]
    %v121 = vld [vmem:[#allocation4 + $0x1c8] sm:$0xff]
    %v122 = vld [vmem:[#allocation4 + $0x1d0] sm:$0xff]
    %v123 = vld [vmem:[#allocation4 + $0x1d8] sm:$0xff]
    %v124 = vld [vmem:[#allocation4 + $0x1e0] sm:$0xff]
    %v125 = vld [vmem:[#allocation4 + $0x1e8] sm:$0xff]
    %v126 = vld [vmem:[#allocation4 + $0x1f0] sm:$0xff]
    %v127 = vld [vmem:[#allocation4 + $0x1f8] sm:$0xff]
    %v128 = vld [vmem:[#allocation4 + $0x200] sm:$0xff]
    %v129 = vld [vmem:[#allocation4 + $0x208] sm:$0xff]
    %v130 = vld [vmem:[#allocation4 + $0x210] sm:$0xff]
    %v131 = vld [vmem:[#allocation4 + $0x218] sm:$0xff]
    %v132 = vld [vmem:[#allocation4 + $0x220] sm:$0xff]
    %v133 = vld [vmem:[#allocation4 + $0x228] sm:$0xff]
    %v134 = vld [vmem:[#allocation4 + $0x230] sm:$0xff]
    %v135 = vld [vmem:[#allocation4 + $0x238] sm:$0xff]
    %v136 = vld [vmem:[#allocation4 + $0x240] sm:$0xff]
    %v137 = vld [vmem:[#allocation4 + $0x248] sm:$0xff]
    %v138 = vld [vmem:[#allocation4 + $0x250] sm:$0xff]
    %v139 = vld [vmem:[#allocation4 + $0x258] sm:$0xff]
    %v140 = vld [vmem:[#allocation4 + $0x260] sm:$0xff]
    %v141 = vld [vmem:[#allocation4 + $0x268] sm:$0xff]
    %v142 = vld [vmem:[#allocation4 + $0x270] sm:$0xff]
    %v143 = vld [vmem:[#allocation4 + $0x278] sm:$0xff]
    %v144 = vld [vmem:[#allocation4 + $0x280] sm:$0xff]
    %v145 = vld [vmem:[#allocation4 + $0x288] sm:$0xff]
    %v146 = vld [vmem:[#allocation4 + $0x290] sm:$0xff]
    %v147 = vld [vmem:[#allocation4 + $0x298] sm:$0xff]
    %v148 = vld [vmem:[#allocation4 + $0x2a0] sm:$0xff]
    %v149 = vld [vmem:[#allocation4 + $0x2a8] sm:$0xff]
    %v150 = vld [vmem:[#allocation4 + $0x2b0] sm:$0xff]
    %v151 = vld [vmem:[#allocation4 + $0x2b8] sm:$0xff]
    %v152 = vld [vmem:[#allocation4 + $0x2c0] sm:$0xff]
    %v153 = vld [vmem:[#allocation4 + $0x2c8] sm:$0xff]
    %v154 = vld [vmem:[#allocation4 + $0x2d0] sm:$0xff]
    %v155 = vld [vmem:[#allocation4 + $0x2d8] sm:$0xff]
    %v156 = vld [vmem:[#allocation4 + $0x2e0] sm:$0xff]
    %v157 = vld [vmem:[#allocation4 + $0x2e8] sm:$0xff]
    %v158 = vld [vmem:[#allocation4 + $0x2f0] sm:$0xff]
    %v159 = vld [vmem:[#allocation4 + $0x2f8] sm:$0xff]
    %v160 = vld [vmem:[#allocation4 + $0x300] sm:$0xff]
    %v161 = vld [vmem:[#allocation4 + $0x308] sm:$0xff]
    %v162 = vld [vmem:[#allocation4 + $0x310] sm:$0xff]
    %v163 = vld [vmem:[#allocation4 + $0x318] sm:$0xff]
    %v164 = vld [vmem:[#allocation4 + $0x320] sm:$0xff]
    %v165 = vld [vmem:[#allocation4 + $0x328] sm:$0xff]
    %v166 = vld [vmem:[#allocation4 + $0x330] sm:$0xff]
    %v167 = vld [vmem:[#allocation4 + $0x338] sm:$0xff]
    %v168 = vld [vmem:[#allocation4 + $0x340] sm:$0xff]
    %v169 = vld [vmem:[#allocation4 + $0x348] sm:$0xff]
    %v170 = vld [vmem:[#allocation4 + $0x350] sm:$0xff]
    %v171 = vld [vmem:[#allocation4 + $0x358] sm:$0xff]
    %v172 = vld [vmem:[#allocation4 + $0x360] sm:$0xff]
    %v173 = vld [vmem:[#allocation4 + $0x368] sm:$0xff]
    %v174 = vld [vmem:[#allocation4 + $0x370] sm:$0xff]
    %v175 = vld [vmem:[#allocation4 + $0x378] sm:$0xff]
    %v176 = vld [vmem:[#allocation4 + $0x380] sm:$0xff]
    %v177 = vld [vmem:[#allocation4 + $0x388] sm:$0xff]
    %v178 = vld [vmem:[#allocation4 + $0x390] sm:$0xff]
    %v179 = vld [vmem:[#allocation4 + $0x398] sm:$0xff]
    %v180 = vld [vmem:[#allocation4 + $0x3a0] sm:$0xff]
    %v181 = vld [vmem:[#allocation4 + $0x3a8] sm:$0xff]
    %v182 = vld [vmem:[#allocation4 + $0x3b0] sm:$0xff]
    %v183 = vld [vmem:[#allocation4 + $0x3b8] sm:$0xff]
    %v184 = vld [vmem:[#allocation4 + $0x3c0] sm:$0xff]
    %v185 = vld [vmem:[#allocation4 + $0x3c8] sm:$0xff]
    %v186 = vld [vmem:[#allocation4 + $0x3d0] sm:$0xff]
    %v187 = vld [vmem:[#allocation4 + $0x3d8] sm:$0xff]
    %v188 = vld [vmem:[#allocation4 + $0x3e0] sm:$0xff]
    %v189 = vld [vmem:[%s2] sm:$0x1]
    %v191 = vperm.slane %v189, 0
    %vm193 = vcmask 850944
    %v195 = vsel %vm193, %v63, 0
    %197 = vmatpush.msra.mxu0 %v79
    %198 = vmatpush.msra.mxu0 %v78
    %199 = vmatpush.msra.mxu0 %v77
    %200 = vmatpush.msra.mxu0 %v76
    %201 = vmatpush.msra.mxu0 %v75
    %202 = vmatpush.msra.mxu0 %v74
    %203 = vmatpush.msra.mxu0 %v73
    %204 = vmatpush.msra.mxu0 %v72
    %205 = vmatpush.msra.mxu0 %v71
    %206 = vmatpush.msra.mxu0 %v70
    %207 = vmatpush.msra.mxu0 %v69
    %208 = vmatpush.msra.mxu0 %v68
    %209 = vmatpush.msra.mxu0 %v67
    %210 = vmatpush.msra.mxu0 %v66
    %211 = vmatpush.msra.mxu0 %v65
    %212 = vmatpush.msra.mxu0 %v64
    %213 = vmatmul.f32.gmra.mxu0 %v56
    %v214 = vpop.f32.mrf.mxu0
    %v215 = vadd.f32 %v191, %v214
    %216 = vdwg.mxu0
    %217 = vmatpush.msra.mxu0 %v95
    %218 = vmatpush.msra.mxu0 %v94
    %219 = vmatpush.msra.mxu0 %v93
    %220 = vmatpush.msra.mxu0 %v92
    %221 = vmatpush.msra.mxu0 %v91
    %222 = vmatpush.msra.mxu0 %v90
    %223 = vmatpush.msra.mxu0 %v89
    %224 = vmatpush.msra.mxu0 %v88
    %225 = vmatpush.msra.mxu0 %v87
    %226 = vmatpush.msra.mxu0 %v86
    %227 = vmatpush.msra.mxu0 %v85
    %228 = vmatpush.msra.mxu0 %v84
    %229 = vmatpush.msra.mxu0 %v83
    %230 = vmatpush.msra.mxu0 %v82
    %231 = vmatpush.msra.mxu0 %v81
    %232 = vmatpush.msra.mxu0 %v80
    %233 = vmatmul.f32.gmra.mxu0 %v57
    %v234 = vpop.f32.mrf.mxu0
    %v235 = vadd.f32 %v215, %v234
    %236 = vdwg.mxu0
    %237 = vmatpush.msra.mxu0 %v111
    %238 = vmatpush.msra.mxu0 %v110
    %239 = vmatpush.msra.mxu0 %v109
    %240 = vmatpush.msra.mxu0 %v108
    %241 = vmatpush.msra.mxu0 %v107
    %242 = vmatpush.msra.mxu0 %v106
    %243 = vmatpush.msra.mxu0 %v105
    %244 = vmatpush.msra.mxu0 %v104
    %245 = vmatpush.msra.mxu0 %v103
    %246 = vmatpush.msra.mxu0 %v102
    %247 = vmatpush.msra.mxu0 %v101
    %248 = vmatpush.msra.mxu0 %v100
    %249 = vmatpush.msra.mxu0 %v99
    %250 = vmatpush.msra.mxu0 %v98
    %251 = vmatpush.msra.mxu0 %v97
    %252 = vmatpush.msra.mxu0 %v96
    %253 = vmatmul.f32.gmra.mxu0 %v58
    %v254 = vpop.f32.mrf.mxu0
    %v255 = vadd.f32 %v235, %v254
    %256 = vdwg.mxu0
    %257 = vmatpush.msra.mxu0 %v127
    %258 = vmatpush.msra.mxu0 %v126
    %259 = vmatpush.msra.mxu0 %v125
    %260 = vmatpush.msra.mxu0 %v124
    %261 = vmatpush.msra.mxu0 %v123
    %262 = vmatpush.msra.mxu0 %v122
    %263 = vmatpush.msra.mxu0 %v121
    %264 = vmatpush.msra.mxu0 %v120
    %265 = vmatpush.msra.mxu0 %v119
    %266 = vmatpush.msra.mxu0 %v118
    %267 = vmatpush.msra.mxu0 %v117
    %268 = vmatpush.msra.mxu0 %v116
    %269 = vmatpush.msra.mxu0 %v115
    %270 = vmatpush.msra.mxu0 %v114
    %271 = vmatpush.msra.mxu0 %v113
    %272 = vmatpush.msra.mxu0 %v112
    %273 = vmatmul.f32.gmra.mxu0 %v59
    %v274 = vpop.f32.mrf.mxu0
    %v275 = vadd.f32 %v255, %v274
    %276 = vdwg.mxu0
    %277 = vmatpush.msra.mxu0 %v143
    %278 = vmatpush.msra.mxu0 %v142
    %279 = vmatpush.msra.mxu0 %v141
    %280 = vmatpush.msra.mxu0 %v140
    %281 = vmatpush.msra.mxu0 %v139
    %282 = vmatpush.msra.mxu0 %v138
    %283 = vmatpush.msra.mxu0 %v137
    %284 = vmatpush.msra.mxu0 %v136
    %285 = vmatpush.msra.mxu0 %v135
    %286 = vmatpush.msra.mxu0 %v134
    %287 = vmatpush.msra.mxu0 %v133
    %288 = vmatpush.msra.mxu0 %v132
    %289 = vmatpush.msra.mxu0 %v131
    %290 = vmatpush.msra.mxu0 %v130
    %291 = vmatpush.msra.mxu0 %v129
    %292 = vmatpush.msra.mxu0 %v128
    %293 = vmatmul.f32.gmra.mxu0 %v60
    %v294 = vpop.f32.mrf.mxu0
    %v295 = vadd.f32 %v275, %v294
    %296 = vdwg.mxu0
    %297 = vmatpush.msra.mxu0 %v159
    %298 = vmatpush.msra.mxu0 %v158
    %299 = vmatpush.msra.mxu0 %v157
    %300 = vmatpush.msra.mxu0 %v156
    %301 = vmatpush.msra.mxu0 %v155
    %302 = vmatpush.msra.mxu0 %v154
    %303 = vmatpush.msra.mxu0 %v153
    %304 = vmatpush.msra.mxu0 %v152
    %305 = vmatpush.msra.mxu0 %v151
    %306 = vmatpush.msra.mxu0 %v150
    %307 = vmatpush.msra.mxu0 %v149
    %308 = vmatpush.msra.mxu0 %v148
    %309 = vmatpush.msra.mxu0 %v147
    %310 = vmatpush.msra.mxu0 %v146
    %311 = vmatpush.msra.mxu0 %v145
    %312 = vmatpush.msra.mxu0 %v144
    %313 = vmatmul.f32.gmra.mxu0 %v61
    %v314 = vpop.f32.mrf.mxu0
    %v315 = vadd.f32 %v295, %v314
    %316 = vdwg.mxu0
    %317 = vmatpush.msra.mxu0 %v175
    %318 = vmatpush.msra.mxu0 %v174
    %319 = vmatpush.msra.mxu0 %v173
    %320 = vmatpush.msra.mxu0 %v172
    %321 = vmatpush.msra.mxu0 %v171
    %322 = vmatpush.msra.mxu0 %v170
    %323 = vmatpush.msra.mxu0 %v169
    %324 = vmatpush.msra.mxu0 %v168
    %325 = vmatpush.msra.mxu0 %v167
    %326 = vmatpush.msra.mxu0 %v166
    %327 = vmatpush.msra.mxu0 %v165
    %328 = vmatpush.msra.mxu0 %v164
    %329 = vmatpush.msra.mxu0 %v163
    %330 = vmatpush.msra.mxu0 %v162
    %331 = vmatpush.msra.mxu0 %v161
    %332 = vmatpush.msra.mxu0 %v160
    %333 = vmatmul.f32.gmra.mxu0 %v62
    %v334 = vpop.f32.mrf.mxu0
    %v335 = vadd.f32 %v315, %v334
    %336 = vdwg.mxu0
    %337 = vmatpush.msra.mxu0 0.0
    %338 = vmatpush.msra.mxu0 0.0
    %339 = vmatpush.msra.mxu0 0.0
    %340 = vmatpush.msra.mxu0 %v188
    %341 = vmatpush.msra.mxu0 %v187
    %342 = vmatpush.msra.mxu0 %v186
    %343 = vmatpush.msra.mxu0 %v185
    %344 = vmatpush.msra.mxu0 %v184
    %345 = vmatpush.msra.mxu0 %v183
    %346 = vmatpush.msra.mxu0 %v182
    %347 = vmatpush.msra.mxu0 %v181
    %348 = vmatpush.msra.mxu0 %v180
    %349 = vmatpush.msra.mxu0 %v179
    %350 = vmatpush.msra.mxu0 %v178
    %351 = vmatpush.msra.mxu0 %v177
    %352 = vmatpush.msra.mxu0 %v176
    %353 = vmatmul.f32.gmra.mxu0 %v195
    %v354 = vpop.f32.mrf.mxu0
    %v355 = vadd.f32 %v335, %v354
    %356 = vdwg.mxu0
    %v357 = vmax.f32 %v355, 0.0
    %v358 = vld [vmem:[%s3] sm:$0xff]
    %v359 = vld [vmem:[%s3 + $0x8] sm:$0xff]
    %v360 = vld [vmem:[%s3 + $0x10] sm:$0xff]
    %v361 = vld [vmem:[%s3 + $0x18] sm:$0xff]
    %v362 = vld [vmem:[%s3 + $0x20] sm:$0xff]
    %v363 = vld [vmem:[%s3 + $0x28] sm:$0xff]
    %v364 = vld [vmem:[%s3 + $0x30] sm:$0xff]
    %v365 = vld [vmem:[%s3 + $0x38] sm:$0xff]
    %v366 = vld [vmem:[%s3 + $0x40] sm:$0xff]
    %v367 = vld [vmem:[%s3 + $0x48] sm:$0xff]
    %v368 = vld [vmem:[%s3 + $0x50] sm:$0xff]
    %v369 = vld [vmem:[%s3 + $0x58] sm:$0xff]
    %v370 = vld [vmem:[%s3 + $0x60] sm:$0xff]
    %v371 = vld [vmem:[%s3 + $0x68] sm:$0xff]
    %v372 = vld [vmem:[%s3 + $0x70] sm:$0xff]
    %v373 = vld [vmem:[%s3 + $0x78] sm:$0xff]
    %v374 = vld [vmem:[%s4] sm:$0x1]
    %v376 = vperm.slane %v374, 0
    %378 = vmatpush.msra.mxu0 %v373
    %379 = vmatpush.msra.mxu0 %v372
    %380 = vmatpush.msra.mxu0 %v371
    %381 = vmatpush.msra.mxu0 %v370
    %382 = vmatpush.msra.mxu0 %v369
    %383 = vmatpush.msra.mxu0 %v368
    %384 = vmatpush.msra.mxu0 %v367
    %385 = vmatpush.msra.mxu0 %v366
    %386 = vmatpush.msra.mxu0 %v365
    %387 = vmatpush.msra.mxu0 %v364
    %388 = vmatpush.msra.mxu0 %v363
    %389 = vmatpush.msra.mxu0 %v362
    %390 = vmatpush.msra.mxu0 %v361
    %391 = vmatpush.msra.mxu0 %v360
    %392 = vmatpush.msra.mxu0 %v359
    %393 = vmatpush.msra.mxu0 %v358
    %394 = vmatmul.f32.gmra.mxu0 %v357
    %v395 = vpop.f32.mrf.mxu0
    %v396 = vadd.f32 %v376, %v395
    %397 = vdwg.mxu0
    %v398 = vmax.f32 %v396, 0.0
    %v399 = vld [vmem:[%s5] sm:$0xff]
    %v400 = vld [vmem:[%s5 + $0x8] sm:$0xff]
    %v401 = vld [vmem:[%s5 + $0x10] sm:$0xff]
    %v402 = vld [vmem:[%s5 + $0x18] sm:$0xff]
    %v403 = vld [vmem:[%s5 + $0x20] sm:$0xff]
    %v404 = vld [vmem:[%s5 + $0x28] sm:$0xff]
    %v405 = vld [vmem:[%s5 + $0x30] sm:$0xff]
    %v406 = vld [vmem:[%s5 + $0x38] sm:$0xff]
    %v407 = vld [vmem:[%s5 + $0x40] sm:$0xff]
    %v408 = vld [vmem:[%s5 + $0x48] sm:$0xff]
    %v409 = vld [vmem:[%s5 + $0x50] sm:$0xff]
    %v410 = vld [vmem:[%s5 + $0x58] sm:$0xff]
    %v411 = vld [vmem:[%s5 + $0x60] sm:$0xff]
    %v412 = vld [vmem:[%s5 + $0x68] sm:$0xff]
    %v413 = vld [vmem:[%s5 + $0x70] sm:$0xff]
    %v414 = vld [vmem:[%s5 + $0x78] sm:$0xff]
    %v415 = vld [vmem:[%s6] sm:$0x1]
    %v417 = vperm.slane %v415, 0
    %419 = vmatpush.msra.mxu0 %v414
    %420 = vmatpush.msra.mxu0 %v413
    %421 = vmatpush.msra.mxu0 %v412
    %422 = vmatpush.msra.mxu0 %v411
    %423 = vmatpush.msra.mxu0 %v410
    %424 = vmatpush.msra.mxu0 %v409
    %425 = vmatpush.msra.mxu0 %v408
    %426 = vmatpush.msra.mxu0 %v407
    %427 = vmatpush.msra.mxu0 %v406
    %428 = vmatpush.msra.mxu0 %v405
    %429 = vmatpush.msra.mxu0 %v404
    %430 = vmatpush.msra.mxu0 %v403
    %431 = vmatpush.msra.mxu0 %v402
    %432 = vmatpush.msra.mxu0 %v401
    %433 = vmatpush.msra.mxu0 %v400
    %434 = vmatpush.msra.mxu0 %v399
    %435 = vmatmul.f32.gmra.mxu0 %v398
    %v436 = vpop.f32.mrf.mxu0
    %v437 = vadd.f32 %v417, %v436
    %438 = vdwg.mxu0
    %vm439 = vcmask 64512
    %440 = vst.msk [vmem:[%s7] sm:$0xff] %vm439, %v437
    // Predicated region
    $region38: #{mlp_forward.1} parent=1 // pred_check
      _
    $region39: #{mlp_forward.1} parent=1 // pred_check_branch
      %442 = sbr.rel (0) target = $region41
    $region40: #{mlp_forward.1} parent=1 // pred_region
      _
    $region41: #{mlp_forward.1} parent=1 // pred_fallthru
      _
    // Predicated region
    $region42: #{mlp_forward.1} parent=1 // pred_check
      _
    $region43: #{mlp_forward.1} parent=1 // pred_check_branch
      %444 = sbr.rel (0) target = $region45
    $region44: #{mlp_forward.1} parent=1 // pred_region
      _
    $region45: #{mlp_forward.1} parent=1 // pred_fallthru
      _
    %445 = vsyncpa [#allocation3], 1
    %446 = vsyncpa [#allocation5], 1

</llo_original>
